<compile_context>
chip_gen: v7x
topology: tpu7x:2x2x1
jax: 0.10.0
libtpu: 0.0.40
codegen_flags: <defaults>
</compile_context>

<pallas_src>
import functools
import math

import jax
import jax.numpy as jnp
from jax import lax
from jax.experimental import pallas as pl
from jax.experimental.pallas import tpu as pltpu

D_MODEL = 32
N_HEAD = 2
HEAD_DIM = D_MODEL // N_HEAD
D_HIDDEN = 4 * D_MODEL
LN_EPS = 1e-5
NEG_INF = -1e9
TM_MAX = 256                      # query-row tile size cap


def _align128(n: int) -> int:
    return ((n + 127) // 128) * 128


# Column offsets of the packed bf16 weight slab [w_q | w_kv | w_proj | w_mlp1];
# every weight slice starts at a 128-lane-aligned offset.
Q_OFF = 0
KV_OFF = _align128(D_MODEL)                 # 128
PROJ_OFF = KV_OFF + _align128(2 * D_MODEL)  # 256
W1_OFF = PROJ_OFF + _align128(D_MODEL)      # 384
SLAB_W = W1_OFF + _align128(D_HIDDEN)       # 512

# Rows of the packed f32 vector-parameter slab (16, 128); every vector starts at lane 0.
VEC_H, VEC_W = 16, 128
ROW_LN1_G, ROW_LN1_B, ROW_LN2_G, ROW_LN2_B = 0, 1, 2, 3
ROW_BP, ROW_B2, ROW_B1, ROW_BQ, ROW_BKV = 4, 5, 6, 7, 8


def _layernorm(v, gamma, beta):
    mu = jnp.mean(v, axis=-1, keepdims=True)
    var = jnp.mean((v - mu) ** 2, axis=-1, keepdims=True)
    return (v - mu) * lax.rsqrt(var + LN_EPS) * gamma + beta


def _gelu_exact(v):
    # nn.GELU() default (approximate='none'): 0.5 * x * (1 + erf(x / sqrt(2)))
    return 0.5 * v * (1.0 + lax.erf(v * (1.0 / math.sqrt(2.0))))


def block_kernel(x_ref, bcol_ref, brow_ref, wslab_ref, w2_ref, vp_ref, o_ref, *, tm):
    C = D_MODEL
    qi = pl.program_id(0)
    qstart = pl.multiple_of(qi * tm, tm)

    x_full = x_ref[...]                              # (N, C) f32, VMEM-resident
    x_q = x_ref[pl.ds(qstart, tm), :]                # (TM, C) f32 query tile
    b_q = bcol_ref[pl.ds(qstart, tm), :]             # (TM, 1) int32
    b_k = brow_ref[...]                              # (1, N) int32

    wslab = wslab_ref[...]                           # (C, SLAB_W) bf16
    w2 = w2_ref[...]                                 # (4C, C) bf16
    vp = vp_ref[...]                                 # (16, 128) f32

    ln1_g = vp[ROW_LN1_G:ROW_LN1_G + 1, 0:C]
    ln1_b = vp[ROW_LN1_B:ROW_LN1_B + 1, 0:C]
    ln2_g = vp[ROW_LN2_G:ROW_LN2_G + 1, 0:C]
    ln2_b = vp[ROW_LN2_B:ROW_LN2_B + 1, 0:C]
    b_p = vp[ROW_BP:ROW_BP + 1, 0:C]
    b_2 = vp[ROW_B2:ROW_B2 + 1, 0:C]
    b_1 = vp[ROW_B1:ROW_B1 + 1, 0:D_HIDDEN]
    b_qb = vp[ROW_BQ:ROW_BQ + 1, 0:C]
    b_kvb = vp[ROW_BKV:ROW_BKV + 1, 0:2 * C]

    w_q = wslab[:, Q_OFF:Q_OFF + C]                  # (C, C)
    w_kv = wslab[:, KV_OFF:KV_OFF + 2 * C]           # (C, 2C) = [w_k | w_v]
    w_proj = wslab[:, PROJ_OFF:PROJ_OFF + C]         # (C, C)
    w_1 = wslab[:, W1_OFF:W1_OFF + D_HIDDEN]         # (C, 4C)

    # ---- attention branch ----
    h_q = _layernorm(x_q, ln1_g, ln1_b)
    h_kv = _layernorm(x_full, ln1_g, ln1_b)
    # bf16 MXU operands, f32 accumulation.
    q = jnp.dot(h_q.astype(jnp.bfloat16), w_q,
                preferred_element_type=jnp.float32) + b_qb          # (TM, C)
    kv = jnp.dot(h_kv.astype(jnp.bfloat16), w_kv,
                 preferred_element_type=jnp.float32) + b_kvb        # (N, 2C)

    same_seq = b_q == b_k                                           # (TM, N) mask in-kernel
    scale = 1.0 / math.sqrt(HEAD_DIM)

    head_outs = []
    for hh in range(N_HEAD):        # static unroll over the 2 heads
        s = hh * HEAD_DIM
        qh = q[:, s:s + HEAD_DIM].astype(jnp.bfloat16)              # (TM, hd)
        kh = kv[:, s:s + HEAD_DIM].astype(jnp.bfloat16)             # (N, hd)
        vh = kv[:, C + s:C + s + HEAD_DIM].astype(jnp.bfloat16)     # (N, hd)
        att = lax.dot_general(qh, kh, (((1,), (1,)), ((), ())),
                              preferred_element_type=jnp.float32) * scale  # (TM, N)
        att = jnp.where(same_seq, att, NEG_INF)
        att = jnp.exp(att - jnp.max(att, axis=-1, keepdims=True))
        inv_l = pl.reciprocal(jnp.sum(att, axis=-1, keepdims=True), approx=True)
        head = jnp.dot(att.astype(jnp.bfloat16), vh,
                       preferred_element_type=jnp.float32)          # (TM, hd)
        head_outs.append(head * inv_l)

    # Both heads live in one 128-lane tile -> lane-offset concat, single proj matmul.
    y_cat = jnp.concatenate(head_outs, axis=-1)                     # (TM, C)
    y = jnp.dot(y_cat.astype(jnp.bfloat16), w_proj,
                preferred_element_type=jnp.float32) + b_p

    x1 = x_q + y                    # residual 1

    # ---- MLP branch ----
    h2 = _layernorm(x1, ln2_g, ln2_b)
    m = jnp.dot(h2.astype(jnp.bfloat16), w_1,
                preferred_element_type=jnp.float32) + b_1
    m = _gelu_exact(m)
    m = jnp.dot(m.astype(jnp.bfloat16), w2,
                preferred_element_type=jnp.float32) + b_2
    o_ref[...] = x1 + m             # residual 2


def pack_params(params):
    """Pack the 16 parameter tensors once at init (hoisted out of the forward path)."""
    C = D_MODEL
    wslab = jnp.zeros((C, SLAB_W), jnp.float32)
    wslab = wslab.at[:, Q_OFF:Q_OFF + C].set(params["wq"])
    wslab = wslab.at[:, KV_OFF:KV_OFF + 2 * C].set(
        jnp.concatenate([params["wk"], params["wv"]], axis=1))
    wslab = wslab.at[:, PROJ_OFF:PROJ_OFF + C].set(params["wp"])
    wslab = wslab.at[:, W1_OFF:W1_OFF + D_HIDDEN].set(params["w1"])

    vp = jnp.zeros((VEC_H, VEC_W), jnp.float32)
    vp = vp.at[ROW_LN1_G, 0:C].set(params["ln1_g"].reshape(-1))
    vp = vp.at[ROW_LN1_B, 0:C].set(params["ln1_b"].reshape(-1))
    vp = vp.at[ROW_LN2_G, 0:C].set(params["ln2_g"].reshape(-1))
    vp = vp.at[ROW_LN2_B, 0:C].set(params["ln2_b"].reshape(-1))
    vp = vp.at[ROW_BP, 0:C].set(params["bp"].reshape(-1))
    vp = vp.at[ROW_B2, 0:C].set(params["b2"].reshape(-1))
    vp = vp.at[ROW_B1, 0:D_HIDDEN].set(params["b1"].reshape(-1))
    vp = vp.at[ROW_BQ, 0:C].set(params["bq"].reshape(-1))
    vp = vp.at[ROW_BKV, 0:2 * C].set(
        jnp.concatenate([params["bk"].reshape(-1), params["bv"].reshape(-1)]))

    # bf16 weights for the MXU; LN params / biases stay f32 (added post-accumulation).
    return wslab.astype(jnp.bfloat16), params["w2"].astype(jnp.bfloat16), vp


def block_forward(x_flat, batch_index, wslab, w2, vp):
    """x_flat: (N, d_model) flat ragged token buffer; batch_index: (N,) sequence id per token."""
    N, C = x_flat.shape
    if N <= TM_MAX:
        tm = N
    else:
        assert N % TM_MAX == 0, "TODO(synk): pad N to a multiple of TM_MAX"
        tm = TM_MAX
    n_tiles = N // tm

    bcol = batch_index.reshape(N, 1).astype(jnp.int32)
    brow = batch_index.reshape(1, N).astype(jnp.int32)

    # Scoped-VMEM limit from the working-set estimate (with headroom, capped for v7x).
    vmem_est = (
        N * C * 4                      # resident x
        + N * 2 * C * 4                # kv activations
        + 4 * tm * N * 4               # per-head score/exp temporaries
        + tm * D_HIDDEN * 4            # MLP hidden
        + (C * SLAB_W + D_HIDDEN * C) * 2
        + 8 * tm * C * 4
    )
    vmem_limit = int(min(48 * 1024 * 1024, max(16 * 1024 * 1024, 2 * vmem_est)))

    flops = int(2 * N * C * (3 * C + C + 8 * C)            # QKV + proj + MLP
                + 2 * 2 * N * N * HEAD_DIM * N_HEAD)       # scores + att@v
    cost = pl.CostEstimate(flops=flops,
                           transcendentals=int(N_HEAD * N * N + N * D_HIDDEN),
                           bytes_accessed=int(2 * N * C * 4 + C * SLAB_W * 2))

    # Alias x -> out only for single-tile grids: with multiple tiles the resident-x
    # input reads the same HBM buffer that other cores' output tiles write.
    io_aliases = {0: 0} if n_tiles == 1 else {}

    kernel = functools.partial(block_kernel, tm=tm)
    return pl.pallas_call(
        kernel,
        out_shape=jax.ShapeDtypeStruct((N, C), jnp.float32),
        grid=(n_tiles,),
        in_specs=[
            pl.BlockSpec((N, C), lambda i: (0, 0)),          # x, full-resident
            pl.BlockSpec((N, 1), lambda i: (0, 0)),          # batch_index column
            pl.BlockSpec((1, N), lambda i: (0, 0)),          # batch_index row
            pl.BlockSpec((C, SLAB_W), lambda i: (0, 0)),     # packed bf16 weights
            pl.BlockSpec((D_HIDDEN, C), lambda i: (0, 0)),   # w_mlp2 (bf16)
            pl.BlockSpec((VEC_H, VEC_W), lambda i: (0, 0)),  # LN params + biases (f32)
        ],
        out_specs=pl.BlockSpec((tm, C), lambda i: (i, 0)),
        input_output_aliases=io_aliases,
        compiler_params=pltpu.CompilerParams(
            dimension_semantics=("parallel",),
            vmem_limit_bytes=vmem_limit),
        cost_estimate=cost,
    )(x_flat, bcol, brow, wslab, w2, vp)


def init_params(key, d_model=D_MODEL):
    ks = jax.random.split(key, 8)
    scale = 0.05
    return {
        "ln1_g": jnp.ones((1, d_model), jnp.float32),
        "ln1_b": jnp.zeros((1, d_model), jnp.float32),
        "wq": scale * jax.random.normal(ks[0], (d_model, d_model), jnp.float32),
        "bq": scale * jax.random.normal(ks[1], (1, d_model), jnp.float32),
        "wk": scale * jax.random.normal(ks[2], (d_model, d_model), jnp.float32),
        "bk": jnp.zeros((1, d_model), jnp.float32),
        "wv": scale * jax.random.normal(ks[3], (d_model, d_model), jnp.float32),
        "bv": jnp.zeros((1, d_model), jnp.float32),
        "wp": scale * jax.random.normal(ks[4], (d_model, d_model), jnp.float32),
        "bp": jnp.zeros((1, d_model), jnp.float32),
        "ln2_g": jnp.ones((1, d_model), jnp.float32),
        "ln2_b": jnp.zeros((1, d_model), jnp.float32),
        "w1": scale * jax.random.normal(ks[5], (d_model, 4 * d_model), jnp.float32),
        "b1": scale * jax.random.normal(ks[6], (1, 4 * d_model), jnp.float32),
        "w2": scale * jax.random.normal(ks[7], (4 * d_model, d_model), jnp.float32),
        "b2": jnp.zeros((1, d_model), jnp.float32),
    }


def block_reference(x_flat, params, nbatch, nseq):
    """Pure-JAX f32 reference mirroring the PyTorch Block forward (dense path)."""
    C = x_flat.shape[-1]
    x = x_flat.reshape(nbatch, nseq, C)

    def ln(v, g, b):
        mu = jnp.mean(v, axis=-1, keepdims=True)
        var = jnp.mean((v - mu) ** 2, axis=-1, keepdims=True)
        return (v - mu) / jnp.sqrt(var + LN_EPS) * g + b

    h = ln(x, params["ln1_g"], params["ln1_b"])
    q = h @ params["wq"] + params["bq"]
    k = h @ params["wk"] + params["bk"]
    v = h @ params["wv"] + params["bv"]

    def split(t):  # (B, T, C) -> (B, nh, T, hd)
        return t.reshape(nbatch, nseq, N_HEAD, HEAD_DIM).transpose(0, 2, 1, 3)

    qh, kh, vh = split(q), split(k), split(v)
    att = jnp.einsum("bhtd,bhsd->bhts", qh, kh) / math.sqrt(HEAD_DIM)
    att = jax.nn.softmax(att, axis=-1)
    y = jnp.einsum("bhts,bhsd->bhtd", att, vh)
    y = y.transpose(0, 2, 1, 3).reshape(nbatch, nseq, C)
    y = y @ params["wp"] + params["bp"]
    x = x + y

    h2 = ln(x, params["ln2_g"], params["ln2_b"])
    m = h2 @ params["w1"] + params["b1"]
    m = jax.nn.gelu(m, approximate=False)
    m = m @ params["w2"] + params["b2"]
    x = x + m
    return x.reshape(nbatch * nseq, C)


if __name__ == "__main__":
    key = jax.random.PRNGKey(0)
    kx, kp = jax.random.split(key)

    nbatch, nseq = 2, 8
    N = nbatch * nseq
    x = jax.random.normal(kx, (N, D_MODEL), jnp.float32)
    batch_index = jnp.repeat(jnp.arange(nbatch, dtype=jnp.int32), nseq)
    params = init_params(kp)

    # Pack parameters once at init (hoisted out of the per-forward path).
    wslab, w2, vp = pack_params(params)

    # Reference computed before the kernel call (x may be aliased to the output).
    ref = block_reference(x, params, nbatch, nseq)

    out = block_forward(x, batch_index, wslab, w2, vp)
    out = jax.block_until_ready(out)

    assert out.shape == (N, D_MODEL)
    # bf16 MXU operands (f32 accumulation) + approx reciprocal -> relaxed tolerance.
    assert jnp.allclose(out, ref, atol=1e-2, rtol=1e-2), "mismatch vs JAX reference"

    print("KERNEL_OK")
</pallas_src>

<mosaic_0001>
module attributes {stable_mosaic.version = 11 : i64} {
  func.func @block_kernel(%arg0: i32, %arg1: memref<16x32xf32, #tpu.memory_space<vmem>>, %arg2: memref<16x1xi32, #tpu.memory_space<vmem>>, %arg3: memref<1x16xi32, #tpu.memory_space<vmem>>, %arg4: memref<32x512xbf16, #tpu.memory_space<vmem>>, %arg5: memref<128x32xbf16, #tpu.memory_space<vmem>>, %arg6: memref<16x128xf32, #tpu.memory_space<vmem>>, %arg7: memref<16x32xf32, #tpu.memory_space<vmem>>) attributes {dimension_semantics = [#tpu.dimension_semantics<parallel>], iteration_bounds = array<i64: 1>, scalar_prefetch = 0 : i64, scratch_operands = 0 : i64, tpu.core_type = #tpu.core_type<tc>, window_params = [{pipeline_mode = #tpu.pipeline_mode<synchronous>, transform_indices = @transform_0, window_bounds = array<i64: 16, 32>}, {pipeline_mode = #tpu.pipeline_mode<synchronous>, transform_indices = @transform_1, window_bounds = array<i64: 16, 1>}, {pipeline_mode = #tpu.pipeline_mode<synchronous>, transform_indices = @transform_2, window_bounds = array<i64: 1, 16>}, {pipeline_mode = #tpu.pipeline_mode<synchronous>, transform_indices = @transform_3, window_bounds = array<i64: 32, 512>}, {pipeline_mode = #tpu.pipeline_mode<synchronous>, transform_indices = @transform_4, window_bounds = array<i64: 128, 32>}, {pipeline_mode = #tpu.pipeline_mode<synchronous>, transform_indices = @transform_5, window_bounds = array<i64: 16, 128>}, {transform_indices = @transform_6, window_bounds = array<i64: 16, 32>}]} {
    %c16_i32 = arith.constant 16 : i32
    %0 = arith.muli %arg0, %c16_i32 : i32
    %1 = tpu.assume_multiple %0, 16 : i32
    %c0 = arith.constant 0 : index
    %c0_0 = arith.constant 0 : index
    %2 = vector.load %arg1[%c0, %c0_0] : memref<16x32xf32, #tpu.memory_space<vmem>>, vector<16x32xf32>
    %3 = arith.index_cast %1 : i32 to index
    %c0_1 = arith.constant 0 : index
    %4 = vector.load %arg1[%3, %c0_1] : memref<16x32xf32, #tpu.memory_space<vmem>>, vector<16x32xf32>
    %5 = arith.index_cast %1 : i32 to index
    %c0_2 = arith.constant 0 : index
    %6 = vector.load %arg2[%5, %c0_2] : memref<16x1xi32, #tpu.memory_space<vmem>>, vector<16x1xi32>
    %c0_3 = arith.constant 0 : index
    %c0_4 = arith.constant 0 : index
    %7 = vector.load %arg3[%c0_3, %c0_4] : memref<1x16xi32, #tpu.memory_space<vmem>>, vector<1x16xi32>
    %c0_5 = arith.constant 0 : index
    %c0_6 = arith.constant 0 : index
    %8 = vector.load %arg4[%c0_5, %c0_6] : memref<32x512xbf16, #tpu.memory_space<vmem>>, vector<32x512xbf16>
    %c0_7 = arith.constant 0 : index
    %c0_8 = arith.constant 0 : index
    %9 = vector.load %arg5[%c0_7, %c0_8] : memref<128x32xbf16, #tpu.memory_space<vmem>>, vector<128x32xbf16>
    %c0_9 = arith.constant 0 : index
    %c0_10 = arith.constant 0 : index
    %10 = vector.load %arg6[%c0_9, %c0_10] : memref<16x128xf32, #tpu.memory_space<vmem>>, vector<16x128xf32>
    %11 = vector.extract_strided_slice %10 {offsets = [0, 0], sizes = [1, 32], strides = [1, 1]} : vector<16x128xf32> to vector<1x32xf32>
    %12 = vector.extract_strided_slice %10 {offsets = [1, 0], sizes = [1, 32], strides = [1, 1]} : vector<16x128xf32> to vector<1x32xf32>
    %13 = vector.extract_strided_slice %10 {offsets = [2, 0], sizes = [1, 32], strides = [1, 1]} : vector<16x128xf32> to vector<1x32xf32>
    %14 = vector.extract_strided_slice %10 {offsets = [3, 0], sizes = [1, 32], strides = [1, 1]} : vector<16x128xf32> to vector<1x32xf32>
    %15 = vector.extract_strided_slice %10 {offsets = [4, 0], sizes = [1, 32], strides = [1, 1]} : vector<16x128xf32> to vector<1x32xf32>
    %16 = vector.extract_strided_slice %10 {offsets = [5, 0], sizes = [1, 32], strides = [1, 1]} : vector<16x128xf32> to vector<1x32xf32>
    %17 = vector.extract_strided_slice %10 {offsets = [6, 0], sizes = [1, 128], strides = [1, 1]} : vector<16x128xf32> to vector<1x128xf32>
    %18 = vector.extract_strided_slice %10 {offsets = [7, 0], sizes = [1, 32], strides = [1, 1]} : vector<16x128xf32> to vector<1x32xf32>
    %19 = vector.extract_strided_slice %10 {offsets = [8, 0], sizes = [1, 64], strides = [1, 1]} : vector<16x128xf32> to vector<1x64xf32>
    %20 = vector.extract_strided_slice %8 {offsets = [0, 0], sizes = [32, 32], strides = [1, 1]} : vector<32x512xbf16> to vector<32x32xbf16>
    %21 = vector.extract_strided_slice %8 {offsets = [0, 128], sizes = [32, 64], strides = [1, 1]} : vector<32x512xbf16> to vector<32x64xbf16>
    %22 = vector.extract_strided_slice %8 {offsets = [0, 256], sizes = [32, 32], strides = [1, 1]} : vector<32x512xbf16> to vector<32x32xbf16>
    %23 = vector.extract_strided_slice %8 {offsets = [0, 384], sizes = [32, 128], strides = [1, 1]} : vector<32x512xbf16> to vector<32x128xbf16>
    %cst = arith.constant dense<0.000000e+00> : vector<16xf32>
    %24 = vector.multi_reduction <add>, %4, %cst [1] : vector<16x32xf32> to vector<16xf32>
    %25 = vector.shape_cast %24 : vector<16xf32> to vector<16x1xf32>
    %cst_11 = arith.constant 3.200000e+01 : f32
    %26 = vector.broadcast %cst_11 : f32 to vector<16x1xf32>
    %27 = arith.divf %25, %26 : vector<16x1xf32>
    %28 = vector.broadcast %27 : vector<16x1xf32> to vector<16x32xf32>
    %29 = arith.subf %4, %28 : vector<16x32xf32>
    %30 = arith.mulf %29, %29 : vector<16x32xf32>
    %cst_12 = arith.constant dense<0.000000e+00> : vector<16xf32>
    %31 = vector.multi_reduction <add>, %30, %cst_12 [1] : vector<16x32xf32> to vector<16xf32>
    %32 = vector.shape_cast %31 : vector<16xf32> to vector<16x1xf32>
    %cst_13 = arith.constant 3.200000e+01 : f32
    %33 = vector.broadcast %cst_13 : f32 to vector<16x1xf32>
    %34 = arith.divf %32, %33 : vector<16x1xf32>
    %35 = vector.broadcast %27 : vector<16x1xf32> to vector<16x32xf32>
    %36 = arith.subf %4, %35 : vector<16x32xf32>
    %cst_14 = arith.constant 9.99999974E-6 : f32
    %37 = vector.broadcast %cst_14 : f32 to vector<16x1xf32>
    %38 = arith.addf %34, %37 : vector<16x1xf32>
    %39 = math.rsqrt %38 : vector<16x1xf32>
    %40 = vector.broadcast %39 : vector<16x1xf32> to vector<16x32xf32>
    %41 = arith.mulf %36, %40 : vector<16x32xf32>
    %42 = vector.broadcast %11 : vector<1x32xf32> to vector<16x32xf32>
    %43 = arith.mulf %41, %42 : vector<16x32xf32>
    %44 = vector.broadcast %12 : vector<1x32xf32> to vector<16x32xf32>
    %45 = arith.addf %43, %44 : vector<16x32xf32>
    %cst_15 = arith.constant dense<0.000000e+00> : vector<16xf32>
    %46 = vector.multi_reduction <add>, %2, %cst_15 [1] : vector<16x32xf32> to vector<16xf32>
    %47 = vector.shape_cast %46 : vector<16xf32> to vector<16x1xf32>
    %cst_16 = arith.constant 3.200000e+01 : f32
    %48 = vector.broadcast %cst_16 : f32 to vector<16x1xf32>
    %49 = arith.divf %47, %48 : vector<16x1xf32>
    %50 = vector.broadcast %49 : vector<16x1xf32> to vector<16x32xf32>
    %51 = arith.subf %2, %50 : vector<16x32xf32>
    %52 = arith.mulf %51, %51 : vector<16x32xf32>
    %cst_17 = arith.constant dense<0.000000e+00> : vector<16xf32>
    %53 = vector.multi_reduction <add>, %52, %cst_17 [1] : vector<16x32xf32> to vector<16xf32>
    %54 = vector.shape_cast %53 : vector<16xf32> to vector<16x1xf32>
    %cst_18 = arith.constant 3.200000e+01 : f32
    %55 = vector.broadcast %cst_18 : f32 to vector<16x1xf32>
    %56 = arith.divf %54, %55 : vector<16x1xf32>
    %57 = vector.broadcast %49 : vector<16x1xf32> to vector<16x32xf32>
    %58 = arith.subf %2, %57 : vector<16x32xf32>
    %cst_19 = arith.constant 9.99999974E-6 : f32
    %59 = vector.broadcast %cst_19 : f32 to vector<16x1xf32>
    %60 = arith.addf %56, %59 : vector<16x1xf32>
    %61 = math.rsqrt %60 : vector<16x1xf32>
    %62 = vector.broadcast %61 : vector<16x1xf32> to vector<16x32xf32>
    %63 = arith.mulf %58, %62 : vector<16x32xf32>
    %64 = vector.broadcast %11 : vector<1x32xf32> to vector<16x32xf32>
    %65 = arith.mulf %63, %64 : vector<16x32xf32>
    %66 = vector.broadcast %12 : vector<1x32xf32> to vector<16x32xf32>
    %67 = arith.addf %65, %66 : vector<16x32xf32>
    %68 = arith.truncf %45 : vector<16x32xf32> to vector<16x32xbf16>
    %cst_20 = arith.constant dense<0.000000e+00> : vector<16x32xf32>
    %69 = tpu.matmul %68, %20, %cst_20 {dimension_numbers = #tpu.dot_dimension_numbers<[1], [0], [0], [1], [0, 0, 1, 1], [], []>} : vector<16x32xbf16>, vector<32x32xbf16>, vector<16x32xf32> -> vector<16x32xf32>
    %70 = vector.broadcast %18 : vector<1x32xf32> to vector<16x32xf32>
    %71 = arith.addf %69, %70 : vector<16x32xf32>
    %72 = arith.truncf %67 : vector<16x32xf32> to vector<16x32xbf16>
    %cst_21 = arith.constant dense<0.000000e+00> : vector<16x64xf32>
    %73 = tpu.matmul %72, %21, %cst_21 {dimension_numbers = #tpu.dot_dimension_numbers<[1], [0], [0], [1], [0, 0, 1, 1], [], []>} : vector<16x32xbf16>, vector<32x64xbf16>, vector<16x64xf32> -> vector<16x64xf32>
    %74 = vector.broadcast %19 : vector<1x64xf32> to vector<16x64xf32>
    %75 = arith.addf %73, %74 : vector<16x64xf32>
    %76 = vector.broadcast %6 : vector<16x1xi32> to vector<16x16xi32>
    %77 = vector.broadcast %7 : vector<1x16xi32> to vector<16x16xi32>
    %78 = arith.cmpi eq, %76, %77 : vector<16x16xi32>
    %79 = vector.extract_strided_slice %71 {offsets = [0, 0], sizes = [16, 16], strides = [1, 1]} : vector<16x32xf32> to vector<16x16xf32>
    %80 = arith.truncf %79 : vector<16x16xf32> to vector<16x16xbf16>
    %81 = vector.extract_strided_slice %75 {offsets = [0, 0], sizes = [16, 16], strides = [1, 1]} : vector<16x64xf32> to vector<16x16xf32>
    %82 = arith.truncf %81 : vector<16x16xf32> to vector<16x16xbf16>
    %83 = vector.extract_strided_slice %75 {offsets = [0, 32], sizes = [16, 16], strides = [1, 1]} : vector<16x64xf32> to vector<16x16xf32>
    %84 = arith.truncf %83 : vector<16x16xf32> to vector<16x16xbf16>
    %cst_22 = arith.constant dense<0.000000e+00> : vector<16x16xf32>
    %85 = tpu.matmul %80, %82, %cst_22 {dimension_numbers = #tpu.dot_dimension_numbers<[1], [1], [0], [0], [0, 0, 1, 0], [], []>} : vector<16x16xbf16>, vector<16x16xbf16>, vector<16x16xf32> -> vector<16x16xf32>
    %cst_23 = arith.constant 2.500000e-01 : f32
    %86 = vector.broadcast %cst_23 : f32 to vector<16x16xf32>
    %87 = arith.mulf %85, %86 : vector<16x16xf32>
    %cst_24 = arith.constant -1.000000e+09 : f32
    %88 = vector.broadcast %cst_24 : f32 to vector<16x16xf32>
    %89 = arith.select %78, %87, %88 : vector<16x16xi1>, vector<16x16xf32>
    %cst_25 = arith.constant dense<0xFF800000> : vector<16xf32>
    %90 = vector.multi_reduction <maximumf>, %89, %cst_25 [1] : vector<16x16xf32> to vector<16xf32>
    %91 = vector.shape_cast %90 : vector<16xf32> to vector<16x1xf32>
    %92 = vector.broadcast %91 : vector<16x1xf32> to vector<16x16xf32>
    %93 = arith.subf %89, %92 : vector<16x16xf32>
    %94 = math.exp %93 : vector<16x16xf32>
    %cst_26 = arith.constant dense<0.000000e+00> : vector<16xf32>
    %95 = vector.multi_reduction <add>, %94, %cst_26 [1] : vector<16x16xf32> to vector<16xf32>
    %96 = vector.shape_cast %95 : vector<16xf32> to vector<16x1xf32>
    %97 = tpu.reciprocal %96 {approx = true} : vector<16x1xf32> -> vector<16x1xf32>
    %98 = arith.truncf %94 : vector<16x16xf32> to vector<16x16xbf16>
    %cst_27 = arith.constant dense<0.000000e+00> : vector<16x16xf32>
    %99 = tpu.matmul %98, %84, %cst_27 {dimension_numbers = #tpu.dot_dimension_numbers<[1], [0], [0], [1], [0, 0, 1, 1], [], []>} : vector<16x16xbf16>, vector<16x16xbf16>, vector<16x16xf32> -> vector<16x16xf32>
    %100 = vector.broadcast %97 : vector<16x1xf32> to vector<16x16xf32>
    %101 = arith.mulf %99, %100 : vector<16x16xf32>
    %102 = vector.extract_strided_slice %71 {offsets = [0, 16], sizes = [16, 16], strides = [1, 1]} : vector<16x32xf32> to vector<16x16xf32>
    %103 = arith.truncf %102 : vector<16x16xf32> to vector<16x16xbf16>
    %104 = vector.extract_strided_slice %75 {offsets = [0, 16], sizes = [16, 16], strides = [1, 1]} : vector<16x64xf32> to vector<16x16xf32>
    %105 = arith.truncf %104 : vector<16x16xf32> to vector<16x16xbf16>
    %106 = vector.extract_strided_slice %75 {offsets = [0, 48], sizes = [16, 16], strides = [1, 1]} : vector<16x64xf32> to vector<16x16xf32>
    %107 = arith.truncf %106 : vector<16x16xf32> to vector<16x16xbf16>
    %cst_28 = arith.constant dense<0.000000e+00> : vector<16x16xf32>
    %108 = tpu.matmul %103, %105, %cst_28 {dimension_numbers = #tpu.dot_dimension_numbers<[1], [1], [0], [0], [0, 0, 1, 0], [], []>} : vector<16x16xbf16>, vector<16x16xbf16>, vector<16x16xf32> -> vector<16x16xf32>
    %cst_29 = arith.constant 2.500000e-01 : f32
    %109 = vector.broadcast %cst_29 : f32 to vector<16x16xf32>
    %110 = arith.mulf %108, %109 : vector<16x16xf32>
    %cst_30 = arith.constant -1.000000e+09 : f32
    %111 = vector.broadcast %cst_30 : f32 to vector<16x16xf32>
    %112 = arith.select %78, %110, %111 : vector<16x16xi1>, vector<16x16xf32>
    %cst_31 = arith.constant dense<0xFF800000> : vector<16xf32>
    %113 = vector.multi_reduction <maximumf>, %112, %cst_31 [1] : vector<16x16xf32> to vector<16xf32>
    %114 = vector.shape_cast %113 : vector<16xf32> to vector<16x1xf32>
    %115 = vector.broadcast %114 : vector<16x1xf32> to vector<16x16xf32>
    %116 = arith.subf %112, %115 : vector<16x16xf32>
    %117 = math.exp %116 : vector<16x16xf32>
    %cst_32 = arith.constant dense<0.000000e+00> : vector<16xf32>
    %118 = vector.multi_reduction <add>, %117, %cst_32 [1] : vector<16x16xf32> to vector<16xf32>
    %119 = vector.shape_cast %118 : vector<16xf32> to vector<16x1xf32>
    %120 = tpu.reciprocal %119 {approx = true} : vector<16x1xf32> -> vector<16x1xf32>
    %121 = arith.truncf %117 : vector<16x16xf32> to vector<16x16xbf16>
    %cst_33 = arith.constant dense<0.000000e+00> : vector<16x16xf32>
    %122 = tpu.matmul %121, %107, %cst_33 {dimension_numbers = #tpu.dot_dimension_numbers<[1], [0], [0], [1], [0, 0, 1, 1], [], []>} : vector<16x16xbf16>, vector<16x16xbf16>, vector<16x16xf32> -> vector<16x16xf32>
    %123 = vector.broadcast %120 : vector<16x1xf32> to vector<16x16xf32>
    %124 = arith.mulf %122, %123 : vector<16x16xf32>
    %125 = tpu.concatenate %101, %124 in 1 : vector<16x16xf32>, vector<16x16xf32> -> vector<16x32xf32>
    %126 = arith.truncf %125 : vector<16x32xf32> to vector<16x32xbf16>
    %cst_34 = arith.constant dense<0.000000e+00> : vector<16x32xf32>
    %127 = tpu.matmul %126, %22, %cst_34 {dimension_numbers = #tpu.dot_dimension_numbers<[1], [0], [0], [1], [0, 0, 1, 1], [], []>} : vector<16x32xbf16>, vector<32x32xbf16>, vector<16x32xf32> -> vector<16x32xf32>
    %128 = vector.broadcast %15 : vector<1x32xf32> to vector<16x32xf32>
    %129 = arith.addf %127, %128 : vector<16x32xf32>
    %130 = arith.addf %4, %129 : vector<16x32xf32>
    %cst_35 = arith.constant dense<0.000000e+00> : vector<16xf32>
    %131 = vector.multi_reduction <add>, %130, %cst_35 [1] : vector<16x32xf32> to vector<16xf32>
    %132 = vector.shape_cast %131 : vector<16xf32> to vector<16x1xf32>
    %cst_36 = arith.constant 3.200000e+01 : f32
    %133 = vector.broadcast %cst_36 : f32 to vector<16x1xf32>
    %134 = arith.divf %132, %133 : vector<16x1xf32>
    %135 = vector.broadcast %134 : vector<16x1xf32> to vector<16x32xf32>
    %136 = arith.subf %130, %135 : vector<16x32xf32>
    %137 = arith.mulf %136, %136 : vector<16x32xf32>
    %cst_37 = arith.constant dense<0.000000e+00> : vector<16xf32>
    %138 = vector.multi_reduction <add>, %137, %cst_37 [1] : vector<16x32xf32> to vector<16xf32>
    %139 = vector.shape_cast %138 : vector<16xf32> to vector<16x1xf32>
    %cst_38 = arith.constant 3.200000e+01 : f32
    %140 = vector.broadcast %cst_38 : f32 to vector<16x1xf32>
    %141 = arith.divf %139, %140 : vector<16x1xf32>
    %142 = vector.broadcast %134 : vector<16x1xf32> to vector<16x32xf32>
    %143 = arith.subf %130, %142 : vector<16x32xf32>
    %cst_39 = arith.constant 9.99999974E-6 : f32
    %144 = vector.broadcast %cst_39 : f32 to vector<16x1xf32>
    %145 = arith.addf %141, %144 : vector<16x1xf32>
    %146 = math.rsqrt %145 : vector<16x1xf32>
    %147 = vector.broadcast %146 : vector<16x1xf32> to vector<16x32xf32>
    %148 = arith.mulf %143, %147 : vector<16x32xf32>
    %149 = vector.broadcast %13 : vector<1x32xf32> to vector<16x32xf32>
    %150 = arith.mulf %148, %149 : vector<16x32xf32>
    %151 = vector.broadcast %14 : vector<1x32xf32> to vector<16x32xf32>
    %152 = arith.addf %150, %151 : vector<16x32xf32>
    %153 = arith.truncf %152 : vector<16x32xf32> to vector<16x32xbf16>
    %cst_40 = arith.constant dense<0.000000e+00> : vector<16x128xf32>
    %154 = tpu.matmul %153, %23, %cst_40 {dimension_numbers = #tpu.dot_dimension_numbers<[1], [0], [0], [1], [0, 0, 1, 1], [], []>} : vector<16x32xbf16>, vector<32x128xbf16>, vector<16x128xf32> -> vector<16x128xf32>
    %155 = vector.broadcast %17 : vector<1x128xf32> to vector<16x128xf32>
    %156 = arith.addf %154, %155 : vector<16x128xf32>
    %cst_41 = arith.constant 5.000000e-01 : f32
    %157 = vector.broadcast %cst_41 : f32 to vector<16x128xf32>
    %158 = arith.mulf %157, %156 : vector<16x128xf32>
    %cst_42 = arith.constant 0.707106769 : f32
    %159 = vector.broadcast %cst_42 : f32 to vector<16x128xf32>
    %160 = arith.mulf %156, %159 : vector<16x128xf32>
    %161 = math.erf %160 : vector<16x128xf32>
    %cst_43 = arith.constant 1.000000e+00 : f32
    %162 = vector.broadcast %cst_43 : f32 to vector<16x128xf32>
    %163 = arith.addf %162, %161 : vector<16x128xf32>
    %164 = arith.mulf %158, %163 : vector<16x128xf32>
    %165 = arith.truncf %164 : vector<16x128xf32> to vector<16x128xbf16>
    %cst_44 = arith.constant dense<0.000000e+00> : vector<16x32xf32>
    %166 = tpu.matmul %165, %9, %cst_44 {dimension_numbers = #tpu.dot_dimension_numbers<[1], [0], [0], [1], [0, 0, 1, 1], [], []>} : vector<16x128xbf16>, vector<128x32xbf16>, vector<16x32xf32> -> vector<16x32xf32>
    %167 = vector.broadcast %16 : vector<1x32xf32> to vector<16x32xf32>
    %168 = arith.addf %166, %167 : vector<16x32xf32>
    %169 = arith.addf %130, %168 : vector<16x32xf32>
    %c0_45 = arith.constant 0 : index
    %c0_46 = arith.constant 0 : index
    %170 = vector.load %arg7[%c0_45, %c0_46] : memref<16x32xf32, #tpu.memory_space<vmem>>, vector<16x32xf32>
    tpu.vector_store %arg7[%c0_45, %c0_46], %169 {strides = array<i32>} : memref<16x32xf32, #tpu.memory_space<vmem>>, vector<16x32xf32>,
    return
  }
  func.func @transform_0(%arg0: i32) -> (i32, i32) {
    %c0_i32 = arith.constant 0 : i32
    %c0_i32_0 = arith.constant 0 : i32
    %c0_i32_1 = arith.constant 0 : i32
    return %c0_i32, %c0_i32_0 : i32, i32
  }
  func.func @transform_1(%arg0: i32) -> (i32, i32) {
    %c0_i32 = arith.constant 0 : i32
    %c0_i32_0 = arith.constant 0 : i32
    %c0_i32_1 = arith.constant 0 : i32
    return %c0_i32, %c0_i32_0 : i32, i32
  }
  func.func @transform_2(%arg0: i32) -> (i32, i32) {
    %c0_i32 = arith.constant 0 : i32
    %c0_i32_0 = arith.constant 0 : i32
    %c0_i32_1 = arith.constant 0 : i32
    return %c0_i32, %c0_i32_0 : i32, i32
  }
  func.func @transform_3(%arg0: i32) -> (i32, i32) {
    %c0_i32 = arith.constant 0 : i32
    %c0_i32_0 = arith.constant 0 : i32
    %c0_i32_1 = arith.constant 0 : i32
    return %c0_i32, %c0_i32_0 : i32, i32
  }
  func.func @transform_4(%arg0: i32) -> (i32, i32) {
    %c0_i32 = arith.constant 0 : i32
    %c0_i32_0 = arith.constant 0 : i32
    %c0_i32_1 = arith.constant 0 : i32
    return %c0_i32, %c0_i32_0 : i32, i32
  }
  func.func @transform_5(%arg0: i32) -> (i32, i32) {
    %c0_i32 = arith.constant 0 : i32
    %c0_i32_0 = arith.constant 0 : i32
    %c0_i32_1 = arith.constant 0 : i32
    return %c0_i32, %c0_i32_0 : i32, i32
  }
  func.func @transform_6(%arg0: i32) -> (i32, i32) {
    %c0_i32 = arith.constant 0 : i32
    %c0_i32_0 = arith.constant 0 : i32
    return %arg0, %c0_i32 : i32, i32
  }
}

</mosaic_0001>

<llo_original>
// kernel: tpu_custom_call.1
$region0: #{tpu_custom_call.1}
  #allocation0 [shape = 'u32[]', space=smem, size = 0x4, offset = 0x4, fixed_abs, tag = 'smem constant byte address 0x4 - core index']
  #allocation1 [shape = 'u32[144,128]{1,0:T(1,128)}', space=vmem, size = 0x12000, scoped, tag = 'internal scratch']
  %s0 = inlined_call_operand.hbm [shape: f32[16,32], index: 0, kind: input, shape index: {}, may-alias: {0,6}]
  %s1 = inlined_call_operand.vmem [shape: s32[16,1], index: 1, kind: input, shape index: {}]
  %s2 = inlined_call_operand.vmem [shape: s32[1,16], index: 2, kind: input, shape index: {}]
  %s3 = inlined_call_operand.vmem [shape: bf16[32,512], index: 3, kind: input, shape index: {}]
  %s4 = inlined_call_operand.vmem [shape: bf16[128,32], index: 4, kind: input, shape index: {}]
  %s5 = inlined_call_operand.vmem [shape: f32[16,128], index: 5, kind: input, shape index: {}]
  %s6 = inlined_call_operand.hbm [shape: f32[16,32], index: 6, kind: output, shape index: {}, may-alias: {0,6}]
  %s7 = sld [smem:[#allocation0]]
  $region38: #{tpu_custom_call.1} parent=0
    _
  %s9 = ssub.s32 1, %s7
  %s10 = scalar_select 0, %s9, %s7
  $region1: #{tpu_custom_call.1} parent=0
    #allocation2 [shape = 'u8[8192]{0}', space=vmem, size = 0x2000, scoped, tag = 'input window, operand 0, single buffered']
    #allocation3 [shape = 's32[1]{0}', space=sflag, size = 0x4, scoped, tag = 'scoped memory for tpu_custom_call.1']
    #allocation4 [shape = 's32[1]{0}', space=sflag, size = 0x4, scoped, tag = 'scoped memory for tpu_custom_call.1']
    #allocation5 [shape = 'u8[8192]{0}', space=vmem, size = 0x2000, scoped, tag = 'output window, operand 0, single buffered']
    %11 = vsyncpa [#allocation3], 0
    %12 = vsyncpa [#allocation4], 0
    // Predicated region
    $region2: #{tpu_custom_call.1} parent=1 // pred_check
      _
    $region3: #{tpu_custom_call.1} parent=1 // pred_check_branch
      %14 = sbr.rel (0) target = $region5
    $region4: #{tpu_custom_call.1} parent=1 // pred_region
      %s16 = ssub.s32 256, 256
      %17 = vsyncadd [#allocation3], %s16
      %s18 = sshll.u32 [#allocation2], 4
      %s19 = int_to_ptr.vmem [resolvable:$true] %s18
      %24 = dma.hbm_to_vmem [thread:$0]  %s0, 256, %s19, [#allocation3], 128, 128, 8
    $region5: #{tpu_custom_call.1} parent=1 // pred_fallthru
      _
    // Predicated region
    $region6: #{tpu_custom_call.1} parent=1 // pred_check
      _
    $region7: #{tpu_custom_call.1} parent=1 // pred_check_branch
      %26 = sbr.rel (0) target = $region9
    $region8: #{tpu_custom_call.1} parent=1 // pred_region
      _
    $region9: #{tpu_custom_call.1} parent=1 // pred_fallthru
      _
    // Predicated region
    $region10: #{tpu_custom_call.1} parent=1 // pred_check
      _
    $region11: #{tpu_custom_call.1} parent=1 // pred_check_branch
      %28 = sbr.rel (0) target = $region13
    $region12: #{tpu_custom_call.1} parent=1 // pred_region
      _
    $region13: #{tpu_custom_call.1} parent=1 // pred_fallthru
      _
    // Predicated region
    $region14: #{tpu_custom_call.1} parent=1 // pred_check
      _
    $region15: #{tpu_custom_call.1} parent=1 // pred_check_branch
      %30 = sbr.rel (0) target = $region17
    $region16: #{tpu_custom_call.1} parent=1 // pred_region
      _
    $region17: #{tpu_custom_call.1} parent=1 // pred_fallthru
      _
    // Predicated region
    $region18: #{tpu_custom_call.1} parent=1 // pred_check
      _
    $region19: #{tpu_custom_call.1} parent=1 // pred_check_branch
      %32 = sbr.rel (0) target = $region21
    $region20: #{tpu_custom_call.1} parent=1 // pred_region
      _
    $region21: #{tpu_custom_call.1} parent=1 // pred_fallthru
      _
    // Predicated region
    $region22: #{tpu_custom_call.1} parent=1 // pred_check
      _
    $region23: #{tpu_custom_call.1} parent=1 // pred_check_branch
      %34 = sbr.rel (0) target = $region25
    $region24: #{tpu_custom_call.1} parent=1 // pred_region
      _
    $region25: #{tpu_custom_call.1} parent=1 // pred_fallthru
      _
    // Predicated region
    $region26: #{tpu_custom_call.1} parent=1 // pred_check
      _
    $region27: #{tpu_custom_call.1} parent=1 // pred_check_branch
      %36 = sbr.rel (0) target = $region29
    $region28: #{tpu_custom_call.1} parent=1 // pred_region
      %37 = dma.done [#allocation3], 256
    $region29: #{tpu_custom_call.1} parent=1 // pred_fallthru
      _
    %s39 = smul.u32 0, 16
    %v40 = vld [vmem:[#allocation2] sm:$0xff]
    %v41 = vld [vmem:[#allocation2 + $0x8] sm:$0xff]
    %s42 = scalar_lea.vmem [#allocation2], %s39
    %v43 = vld [vmem:[%s42] sm:$0xff]
    %v44 = vld [vmem:[%s42 + $0x8] sm:$0xff]
    %s45 = scalar_lea.vmem %s1, %s39
    %v46 = vld [vmem:[%s45] sm:$0xff]
    %v47 = vld [vmem:[%s45 + $0x8] sm:$0xff]
    %v48 = vld [vmem:[%s2] sm:$0x1]
    %v49 = vld [vmem:[%s3] sm:$0xff]
    %v50 = vld [vmem:[%s3 + $0x8] sm:$0xff]
    %v51 = vld [vmem:[%s3 + $0x10] sm:$0xff]
    %v52 = vld [vmem:[%s3 + $0x18] sm:$0xff]
    %v53 = vld [vmem:[%s3 + $0x20] sm:$0xff]
    %v54 = vld [vmem:[%s3 + $0x28] sm:$0xff]
    %v55 = vld [vmem:[%s3 + $0x30] sm:$0xff]
    %v56 = vld [vmem:[%s3 + $0x38] sm:$0xff]
    %v57 = vld [vmem:[%s4] sm:$0xf]
    %v58 = vld [vmem:[%s4 + $0x4] sm:$0xf]
    %v59 = vld [vmem:[%s4 + $0x8] sm:$0xf]
    %v60 = vld [vmem:[%s4 + $0xc] sm:$0xf]
    %v61 = vld [vmem:[%s4 + $0x10] sm:$0xf]
    %v62 = vld [vmem:[%s4 + $0x14] sm:$0xf]
    %v63 = vld [vmem:[%s4 + $0x18] sm:$0xf]
    %v64 = vld [vmem:[%s4 + $0x1c] sm:$0xf]
    %v65 = vld [vmem:[%s4 + $0x20] sm:$0xf]
    %v66 = vld [vmem:[%s4 + $0x24] sm:$0xf]
    %v67 = vld [vmem:[%s4 + $0x28] sm:$0xf]
    %v68 = vld [vmem:[%s4 + $0x2c] sm:$0xf]
    %v69 = vld [vmem:[%s4 + $0x30] sm:$0xf]
    %v70 = vld [vmem:[%s4 + $0x34] sm:$0xf]
    %v71 = vld [vmem:[%s4 + $0x38] sm:$0xf]
    %v72 = vld [vmem:[%s4 + $0x3c] sm:$0xf]
    %v73 = vld [vmem:[%s5] sm:$0xff]
    %v74 = vld [vmem:[%s5 + $0x8] sm:$0xff]
    %vm75 = vcmask 261120
    %v76 = vsel %vm75, %v43, 0.0
    %77 = vadd.xlane.f32.xlu0 %v76
    %v78 = vpop.xlane.xlu0 %77
    %v79 = vsel %vm75, %v44, 0.0
    %80 = vadd.xlane.f32.xlu0 %v79
    %v81 = vpop.xlane.xlu0 %80
    %v82 = vrcp.pop 32.0
    %v83 = vmul.f32 %v78, %v82
    %v84 = vmul.f32 %v81, %v82
    %v85 = vsub.f32 %v43, %v83
    %v86 = vsub.f32 %v44, %v84
    %v87 = vmul.f32 %v85, %v85
    %v88 = vmul.f32 %v86, %v86
    %v89 = vsel %vm75, %v87, 0.0
    %90 = vadd.xlane.f32.xlu0 %v89
    %v91 = vpop.xlane.xlu0 %90
    %v92 = vsel %vm75, %v88, 0.0
    %93 = vadd.xlane.f32.xlu0 %v92
    %v94 = vpop.xlane.xlu0 %93
    %v95 = vmul.f32 %v91, %v82
    %v96 = vmul.f32 %v94, %v82
    %v97 = vadd.f32 %v95, 1e-05
    %v98 = vadd.f32 %v96, 1e-05
    %v99 = vrsqrt.pop %v97
    %v100 = vrsqrt.pop %v98
    %v101 = vmul.f32 %v85, %v99
    %v102 = vmul.f32 %v86, %v100
    %v103 = vlaneseq
    %v104 = vshrl.u32 %v103, 7
    %v105 = vsub.s32 0, %v104
    %v106 = vrot.slane %v73, %v105
    %v107 = vmul.f32 %v101, %v106
    %v108 = vmul.f32 %v102, %v106
    %v109 = vlaneseq
    %v110 = vshrl.u32 %v109, 7
    %v111 = vsub.s32 1, %v110
    %v112 = vrot.slane %v73, %v111
    %v113 = vadd.f32 %v107, %v112
    %v114 = vadd.f32 %v108, %v112
    %v115 = vsel %vm75, %v40, 0.0
    %116 = vadd.xlane.f32.xlu0 %v115
    %v117 = vpop.xlane.xlu0 %116
    %v118 = vsel %vm75, %v41, 0.0
    %119 = vadd.xlane.f32.xlu0 %v118
    %v120 = vpop.xlane.xlu0 %119
    %v121 = vmul.f32 %v117, %v82
    %v122 = vmul.f32 %v120, %v82
    %v123 = vsub.f32 %v40, %v121
    %v124 = vsub.f32 %v41, %v122
    %v125 = vmul.f32 %v123, %v123
    %v126 = vmul.f32 %v124, %v124
    %v127 = vsel %vm75, %v125, 0.0
    %128 = vadd.xlane.f32.xlu0 %v127
    %v129 = vpop.xlane.xlu0 %128
    %v130 = vsel %vm75, %v126, 0.0
    %131 = vadd.xlane.f32.xlu0 %v130
    %v132 = vpop.xlane.xlu0 %131
    %v133 = vmul.f32 %v129, %v82
    %v134 = vmul.f32 %v132, %v82
    %v135 = vadd.f32 %v133, 1e-05
    %v136 = vadd.f32 %v134, 1e-05
    %v137 = vrsqrt.pop %v135
    %v138 = vrsqrt.pop %v136
    %v139 = vmul.f32 %v123, %v137
    %v140 = vmul.f32 %v124, %v138
    %v141 = vmul.f32 %v139, %v106
    %v142 = vmul.f32 %v140, %v106
    %v143 = vadd.f32 %v141, %v112
    %v144 = vadd.f32 %v142, %v112
    %v145 = vpack.c.bf16 %v114, %v113
    %v146 = vlaneseq
    %v147 = vshrl.u32 %v146, 7
    %v148 = vsub.s32 7, %v147
    %v149 = vrot.slane %v73, %v148
    %v154 = vunpack.c.l.b16 %v49
    %v155 = vunpack.c.l.b16 %v51
    %v156 = vunpack.c.l.b16 %v53
    %v157 = vunpack.c.l.b16 %v55
    %v158 = vpack.c.b16 %v155, %v154
    %v159 = vpack.c.b16 %v157, %v156
    %v163 = vsel %vm75, %v145, 0
    %165 = vmatprep.subr.bf16.mxu0 0
    %166 = vmatpush1.bf16.msra.mxu0 %v158
    %167 = vmatprep.subr.bf16.mxu0 0
    %168 = vmatpush1.bf16.msra.mxu0 %v159
    %169 = vmatprep.subr.bf16.mxu0 0
    %170 = vmatpush1.bf16.msra.mxu0 0
    %171 = vmatprep.subr.bf16.mxu0 0
    %172 = vmatpush1.bf16.msra.mxu0 0
    %173 = vmatprep.subr.bf16.mxu0 0
    %174 = vmatpush1.bf16.msra.mxu0 0
    %175 = vmatprep.subr.bf16.mxu0 0
    %176 = vmatpush1.bf16.msra.mxu0 0
    %177 = vmatprep.subr.bf16.mxu0 0
    %178 = vmatpush1.bf16.msra.mxu0 0
    %179 = vmatprep.subr.bf16.mxu0 0
    %180 = vmatpush1.bf16.msra.mxu0 0
    %181 = vmatprep.subr.bf16.mxu0 0
    %182 = vmatpush1.bf16.msra.mxu0 0
    %183 = vmatprep.subr.bf16.mxu0 0
    %184 = vmatpush1.bf16.msra.mxu0 0
    %185 = vmatprep.subr.bf16.mxu0 0
    %186 = vmatpush1.bf16.msra.mxu0 0
    %187 = vmatprep.subr.bf16.mxu0 0
    %188 = vmatpush1.bf16.msra.mxu0 0
    %189 = vmatprep.subr.bf16.mxu0 0
    %190 = vmatpush1.bf16.msra.mxu0 0
    %191 = vmatprep.subr.bf16.mxu0 0
    %192 = vmatpush1.bf16.msra.mxu0 0
    %193 = vmatprep.subr.bf16.mxu0 0
    %194 = vmatpush1.bf16.msra.mxu0 0
    %195 = vmatprep.subr.bf16.mxu0 0
    %196 = vmatpush1.bf16.msra.mxu0 0
    %197 = vmatprep.mubr.bf16.mxu0 0
    %198 = vmatmul.mubr.bf16.gmra.mrb[0].mxu0 %v163
    %v199 = vpop.f32.mrb[0].mxu0
    %v200 = vadd.f32 %v149, %v199
    %v201 = vpop.f32.mrb[0].mxu0
    %v202 = vpop.f32.mrb[0].mxu0
    %v203 = vadd.f32 %v149, %v202
    %v204 = vpop.f32.mrb[0].mxu0
    %205 = vdwg.mxu0
    %v206 = vpack.c.bf16 %v144, %v143
    %v207 = vlaneseq
    %v208 = vshrl.u32 %v207, 7
    %v209 = vsub.s32 0, %v208
    %v210 = vrot.slane %v74, %v209
    %v211 = vunpack.c.h.b16 %v49
    %v212 = vunpack.c.h.b16 %v51
    %v213 = vunpack.c.h.b16 %v53
    %v214 = vunpack.c.h.b16 %v55
    %v215 = vpack.c.b16 %v212, %v211
    %v216 = vpack.c.b16 %v214, %v213
    %v220 = vsel %vm75, %v206, 0
    %222 = vmatprep.subr.bf16.mxu0 0
    %223 = vmatpush1.bf16.msra.mxu0 %v215
    %224 = vmatprep.subr.bf16.mxu0 0
    %225 = vmatpush1.bf16.msra.mxu0 %v216
    %226 = vmatprep.subr.bf16.mxu0 0
    %227 = vmatpush1.bf16.msra.mxu0 0
    %228 = vmatprep.subr.bf16.mxu0 0
    %229 = vmatpush1.bf16.msra.mxu0 0
    %230 = vmatprep.subr.bf16.mxu0 0
    %231 = vmatpush1.bf16.msra.mxu0 0
    %232 = vmatprep.subr.bf16.mxu0 0
    %233 = vmatpush1.bf16.msra.mxu0 0
    %234 = vmatprep.subr.bf16.mxu0 0
    %235 = vmatpush1.bf16.msra.mxu0 0
    %236 = vmatprep.subr.bf16.mxu0 0
    %237 = vmatpush1.bf16.msra.mxu0 0
    %238 = vmatprep.subr.bf16.mxu0 0
    %239 = vmatpush1.bf16.msra.mxu0 0
    %240 = vmatprep.subr.bf16.mxu0 0
    %241 = vmatpush1.bf16.msra.mxu0 0
    %242 = vmatprep.subr.bf16.mxu0 0
    %243 = vmatpush1.bf16.msra.mxu0 0
    %244 = vmatprep.subr.bf16.mxu0 0
    %245 = vmatpush1.bf16.msra.mxu0 0
    %246 = vmatprep.subr.bf16.mxu0 0
    %247 = vmatpush1.bf16.msra.mxu0 0
    %248 = vmatprep.subr.bf16.mxu0 0
    %249 = vmatpush1.bf16.msra.mxu0 0
    %250 = vmatprep.subr.bf16.mxu0 0
    %251 = vmatpush1.bf16.msra.mxu0 0
    %252 = vmatprep.subr.bf16.mxu0 0
    %253 = vmatpush1.bf16.msra.mxu0 0
    %254 = vmatprep.mubr.bf16.mxu0 0
    %255 = vmatmul.mubr.bf16.gmra.mrb[0].mxu0 %v220
    %v256 = vpop.f32.mrb[0].mxu0
    %v257 = vadd.f32 %v210, %v256
    %v258 = vpop.f32.mrb[0].mxu0
    %v259 = vpop.f32.mrb[0].mxu0
    %v260 = vadd.f32 %v210, %v259
    %v261 = vpop.f32.mrb[0].mxu0
    %262 = vdwg.mxu0
    %263 = vset.pattern.permute.xlu0 0
    %264 = vperm.xlu0 %263, %v46
    %v265 = vpop.permute.xlu0 %264
    %266 = vset.pattern.permute.xlu0 0
    %267 = vperm.xlu0 %266, %v47
    %v268 = vpop.permute.xlu0 %267
    %v269 = vlaneseq
    %v270 = vshrl.u32 %v269, 7
    %v271 = vsub.s32 0, %v270
    %v272 = vrot.slane %v48, %v271
    %vm273 = vcmp.eq.s32.totalorder %v265, %v272
    %vm274 = vcmp.eq.s32.totalorder %v268, %v272
    %v275 = vpack.c.bf16 %v203, %v200
    %v276 = vpack.c.bf16 %v260, %v257
    %vm277 = vcmask 130048
    %v279 = vsel %vm277, %v275, 0
    %v282 = vsel %vm277, %v276, 0
    %284 = vmatprep.subr.bf16.mxu0 0
    %285 = vmatpush1.bf16.xpose.msra.mxu0 %v282
    %286 = vmatprep.subr.bf16.mxu0 0
    %287 = vmatpush1.bf16.xpose.msra.mxu0 0
    %288 = vmatprep.subr.bf16.mxu0 0
    %289 = vmatpush1.bf16.xpose.msra.mxu0 0
    %290 = vmatprep.subr.bf16.mxu0 0
    %291 = vmatpush1.bf16.xpose.msra.mxu0 0
    %292 = vmatprep.subr.bf16.mxu0 0
    %293 = vmatpush1.bf16.xpose.msra.mxu0 0
    %294 = vmatprep.subr.bf16.mxu0 0
    %295 = vmatpush1.bf16.xpose.msra.mxu0 0
    %296 = vmatprep.subr.bf16.mxu0 0
    %297 = vmatpush1.bf16.xpose.msra.mxu0 0
    %298 = vmatprep.subr.bf16.mxu0 0
    %299 = vmatpush1.bf16.xpose.msra.mxu0 0
    %300 = vmatprep.subr.bf16.mxu0 0
    %301 = vmatpush1.bf16.xpose.msra.mxu0 0
    %302 = vmatprep.subr.bf16.mxu0 0
    %303 = vmatpush1.bf16.xpose.msra.mxu0 0
    %304 = vmatprep.subr.bf16.mxu0 0
    %305 = vmatpush1.bf16.xpose.msra.mxu0 0
    %306 = vmatprep.subr.bf16.mxu0 0
    %307 = vmatpush1.bf16.xpose.msra.mxu0 0
    %308 = vmatprep.subr.bf16.mxu0 0
    %309 = vmatpush1.bf16.xpose.msra.mxu0 0
    %310 = vmatprep.subr.bf16.mxu0 0
    %311 = vmatpush1.bf16.xpose.msra.mxu0 0
    %312 = vmatprep.subr.bf16.mxu0 0
    %313 = vmatpush1.bf16.xpose.msra.mxu0 0
    %314 = vmatprep.subr.bf16.mxu0 0
    %315 = vmatpush1.bf16.xpose.msra.mxu0 0
    %316 = vmatprep.mubr.bf16.mxu0 0
    %317 = vmatmul.mubr.bf16.gmra.mrb[0].mxu0 %v279
    %v318 = vpop.f32.mrb[0].mxu0
    %v319 = vadd.f32 0.0, %v318
    %v320 = vpop.f32.mrb[0].mxu0
    %v321 = vpop.f32.mrb[0].mxu0
    %v322 = vadd.f32 0.0, %v321
    %v323 = vpop.f32.mrb[0].mxu0
    %324 = vdwg.mxu0
    %v325 = vmul.f32 %v319, 0.25
    %v326 = vmul.f32 %v322, 0.25
    %v327 = vsel %vm273, %v325, -1e+09
    %v328 = vsel %vm274, %v326, -1e+09
    %v329 = vsel %vm277, %v327, -inf
    %330 = vmax.xlane.f32.xlu0 %v329
    %v331 = vpop.xlane.xlu0 %330
    %v332 = vsel %vm277, %v328, -inf
    %333 = vmax.xlane.f32.xlu0 %v332
    %v334 = vpop.xlane.xlu0 %333
    %v335 = vsub.f32 %v327, %v331
    %v336 = vsub.f32 %v328, %v334
    %v337 = vmul.f32 %v335, 1.442695
    %v338 = vpow.pop %v337
    %v339 = vmul.f32 %v336, 1.442695
    %v340 = vpow.pop %v339
    %v341 = vsel %vm277, %v338, 0.0
    %342 = vadd.xlane.f32.xlu0 %v341
    %v343 = vpop.xlane.xlu0 %342
    %v344 = vsel %vm277, %v340, 0.0
    %345 = vadd.xlane.f32.xlu0 %v344
    %v346 = vpop.xlane.xlu0 %345
    %v347 = vrcp.pop %v343
    %v348 = vrcp.pop %v346
    %v349 = vpack.c.bf16 %v340, %v338
    %351 = vrot.lane.b32.xlu0 %v276, 96
    %v352 = vpop.permute.xlu0 %351
    %v355 = vsel %vm277, %v349, 0
    %357 = vmatprep.subr.bf16.mxu0 0
    %358 = vmatpush1.bf16.msra.mxu0 %v352
    %359 = vmatprep.subr.bf16.mxu0 0
    %360 = vmatpush1.bf16.msra.mxu0 0
    %361 = vmatprep.subr.bf16.mxu0 0
    %362 = vmatpush1.bf16.msra.mxu0 0
    %363 = vmatprep.subr.bf16.mxu0 0
    %364 = vmatpush1.bf16.msra.mxu0 0
    %365 = vmatprep.subr.bf16.mxu0 0
    %366 = vmatpush1.bf16.msra.mxu0 0
    %367 = vmatprep.subr.bf16.mxu0 0
    %368 = vmatpush1.bf16.msra.mxu0 0
    %369 = vmatprep.subr.bf16.mxu0 0
    %370 = vmatpush1.bf16.msra.mxu0 0
    %371 = vmatprep.subr.bf16.mxu0 0
    %372 = vmatpush1.bf16.msra.mxu0 0
    %373 = vmatprep.subr.bf16.mxu0 0
    %374 = vmatpush1.bf16.msra.mxu0 0
    %375 = vmatprep.subr.bf16.mxu0 0
    %376 = vmatpush1.bf16.msra.mxu0 0
    %377 = vmatprep.subr.bf16.mxu0 0
    %378 = vmatpush1.bf16.msra.mxu0 0
    %379 = vmatprep.subr.bf16.mxu0 0
    %380 = vmatpush1.bf16.msra.mxu0 0
    %381 = vmatprep.subr.bf16.mxu0 0
    %382 = vmatpush1.bf16.msra.mxu0 0
    %383 = vmatprep.subr.bf16.mxu0 0
    %384 = vmatpush1.bf16.msra.mxu0 0
    %385 = vmatprep.subr.bf16.mxu0 0
    %386 = vmatpush1.bf16.msra.mxu0 0
    %387 = vmatprep.subr.bf16.mxu0 0
    %388 = vmatpush1.bf16.msra.mxu0 0
    %389 = vmatprep.mubr.bf16.mxu0 0
    %390 = vmatmul.mubr.bf16.gmra.mrb[0].mxu0 %v355
    %v391 = vpop.f32.mrb[0].mxu0
    %v392 = vadd.f32 0.0, %v391
    %v393 = vpop.f32.mrb[0].mxu0
    %v394 = vpop.f32.mrb[0].mxu0
    %v395 = vadd.f32 0.0, %v394
    %v396 = vpop.f32.mrb[0].mxu0
    %397 = vdwg.mxu0
    %v398 = vmul.f32 %v392, %v347
    %v399 = vmul.f32 %v395, %v348
    %401 = vrot.lane.b32.xlu0 %v275, 112
    %v402 = vpop.permute.xlu0 %401
    %403 = vrot.lane.b32.xlu0 %v276, 112
    %v404 = vpop.permute.xlu0 %403
    %v406 = vsel %vm277, %v402, 0
    %v409 = vsel %vm277, %v404, 0
    %411 = vmatprep.subr.bf16.mxu0 0
    %412 = vmatpush1.bf16.xpose.msra.mxu0 %v409
    %413 = vmatprep.subr.bf16.mxu0 0
    %414 = vmatpush1.bf16.xpose.msra.mxu0 0
    %415 = vmatprep.subr.bf16.mxu0 0
    %416 = vmatpush1.bf16.xpose.msra.mxu0 0
    %417 = vmatprep.subr.bf16.mxu0 0
    %418 = vmatpush1.bf16.xpose.msra.mxu0 0
    %419 = vmatprep.subr.bf16.mxu0 0
    %420 = vmatpush1.bf16.xpose.msra.mxu0 0
    %421 = vmatprep.subr.bf16.mxu0 0
    %422 = vmatpush1.bf16.xpose.msra.mxu0 0
    %423 = vmatprep.subr.bf16.mxu0 0
    %424 = vmatpush1.bf16.xpose.msra.mxu0 0
    %425 = vmatprep.subr.bf16.mxu0 0
    %426 = vmatpush1.bf16.xpose.msra.mxu0 0
    %427 = vmatprep.subr.bf16.mxu0 0
    %428 = vmatpush1.bf16.xpose.msra.mxu0 0
    %429 = vmatprep.subr.bf16.mxu0 0
    %430 = vmatpush1.bf16.xpose.msra.mxu0 0
    %431 = vmatprep.subr.bf16.mxu0 0
    %432 = vmatpush1.bf16.xpose.msra.mxu0 0
    %433 = vmatprep.subr.bf16.mxu0 0
    %434 = vmatpush1.bf16.xpose.msra.mxu0 0
    %435 = vmatprep.subr.bf16.mxu0 0
    %436 = vmatpush1.bf16.xpose.msra.mxu0 0
    %437 = vmatprep.subr.bf16.mxu0 0
    %438 = vmatpush1.bf16.xpose.msra.mxu0 0
    %439 = vmatprep.subr.bf16.mxu0 0
    %440 = vmatpush1.bf16.xpose.msra.mxu0 0
    %441 = vmatprep.subr.bf16.mxu0 0
    %442 = vmatpush1.bf16.xpose.msra.mxu0 0
    %443 = vmatprep.mubr.bf16.mxu0 0
    %444 = vmatmul.mubr.bf16.gmra.mrb[0].mxu0 %v406
    %v445 = vpop.f32.mrb[0].mxu0
    %v446 = vadd.f32 0.0, %v445
    %v447 = vpop.f32.mrb[0].mxu0
    %v448 = vpop.f32.mrb[0].mxu0
    %v449 = vadd.f32 0.0, %v448
    %v450 = vpop.f32.mrb[0].mxu0
    %451 = vdwg.mxu0
    %v452 = vmul.f32 %v446, 0.25
    %v453 = vmul.f32 %v449, 0.25
    %v454 = vsel %vm273, %v452, -1e+09
    %v455 = vsel %vm274, %v453, -1e+09
    %v456 = vsel %vm277, %v454, -inf
    %457 = vmax.xlane.f32.xlu0 %v456
    %v458 = vpop.xlane.xlu0 %457
    %v459 = vsel %vm277, %v455, -inf
    %460 = vmax.xlane.f32.xlu0 %v459
    %v461 = vpop.xlane.xlu0 %460
    %v462 = vsub.f32 %v454, %v458
    %v463 = vsub.f32 %v455, %v461
    %v464 = vmul.f32 %v462, 1.442695
    %v465 = vpow.pop %v464
    %v466 = vmul.f32 %v463, 1.442695
    %v467 = vpow.pop %v466
    %v468 = vsel %vm277, %v465, 0.0
    %469 = vadd.xlane.f32.xlu0 %v468
    %v470 = vpop.xlane.xlu0 %469
    %v471 = vsel %vm277, %v467, 0.0
    %472 = vadd.xlane.f32.xlu0 %v471
    %v473 = vpop.xlane.xlu0 %472
    %v474 = vrcp.pop %v470
    %v475 = vrcp.pop %v473
    %v476 = vpack.c.bf16 %v467, %v465
    %477 = vrot.lane.b32.xlu0 %v276, 80
    %v478 = vpop.permute.xlu0 %477
    %v481 = vsel %vm277, %v476, 0
    %483 = vmatprep.subr.bf16.mxu0 0
    %484 = vmatpush1.bf16.msra.mxu0 %v478
    %485 = vmatprep.subr.bf16.mxu0 0
    %486 = vmatpush1.bf16.msra.mxu0 0
    %487 = vmatprep.subr.bf16.mxu0 0
    %488 = vmatpush1.bf16.msra.mxu0 0
    %489 = vmatprep.subr.bf16.mxu0 0
    %490 = vmatpush1.bf16.msra.mxu0 0
    %491 = vmatprep.subr.bf16.mxu0 0
    %492 = vmatpush1.bf16.msra.mxu0 0
    %493 = vmatprep.subr.bf16.mxu0 0
    %494 = vmatpush1.bf16.msra.mxu0 0
    %495 = vmatprep.subr.bf16.mxu0 0
    %496 = vmatpush1.bf16.msra.mxu0 0
    %497 = vmatprep.subr.bf16.mxu0 0
    %498 = vmatpush1.bf16.msra.mxu0 0
    %499 = vmatprep.subr.bf16.mxu0 0
    %500 = vmatpush1.bf16.msra.mxu0 0
    %501 = vmatprep.subr.bf16.mxu0 0
    %502 = vmatpush1.bf16.msra.mxu0 0
    %503 = vmatprep.subr.bf16.mxu0 0
    %504 = vmatpush1.bf16.msra.mxu0 0
    %505 = vmatprep.subr.bf16.mxu0 0
    %506 = vmatpush1.bf16.msra.mxu0 0
    %507 = vmatprep.subr.bf16.mxu0 0
    %508 = vmatpush1.bf16.msra.mxu0 0
    %509 = vmatprep.subr.bf16.mxu0 0
    %510 = vmatpush1.bf16.msra.mxu0 0
    %511 = vmatprep.subr.bf16.mxu0 0
    %512 = vmatpush1.bf16.msra.mxu0 0
    %513 = vmatprep.subr.bf16.mxu0 0
    %514 = vmatpush1.bf16.msra.mxu0 0
    %515 = vmatprep.mubr.bf16.mxu0 0
    %516 = vmatmul.mubr.bf16.gmra.mrb[0].mxu0 %v481
    %v517 = vpop.f32.mrb[0].mxu0
    %v518 = vadd.f32 0.0, %v517
    %v519 = vpop.f32.mrb[0].mxu0
    %v520 = vpop.f32.mrb[0].mxu0
    %v521 = vadd.f32 0.0, %v520
    %v522 = vpop.f32.mrb[0].mxu0
    %523 = vdwg.mxu0
    %v524 = vmul.f32 %v518, %v474
    %v525 = vmul.f32 %v521, %v475
    %528 = vrot.lane.b32.xlu0 %v524, 16
    %v529 = vpop.permute.xlu0 %528
    %530 = vrot.lane.b32.xlu0 %v525, 16
    %v531 = vpop.permute.xlu0 %530
    %v534 = vsel %vm277, %v398, %v529
    %v535 = vsel %vm277, %v399, %v531
    %v536 = vpack.c.bf16 %v535, %v534
    %v537 = vlaneseq
    %v538 = vshrl.u32 %v537, 7
    %v539 = vsub.s32 4, %v538
    %v540 = vrot.slane %v73, %v539
    %v545 = vunpack.c.l.b16 %v50
    %v546 = vunpack.c.l.b16 %v52
    %v547 = vunpack.c.l.b16 %v54
    %v548 = vunpack.c.l.b16 %v56
    %v549 = vpack.c.b16 %v546, %v545
    %v550 = vpack.c.b16 %v548, %v547
    %v554 = vsel %vm75, %v536, 0
    %556 = vmatprep.subr.bf16.mxu0 0
    %557 = vmatpush1.bf16.msra.mxu0 %v549
    %558 = vmatprep.subr.bf16.mxu0 0
    %559 = vmatpush1.bf16.msra.mxu0 %v550
    %560 = vmatprep.subr.bf16.mxu0 0
    %561 = vmatpush1.bf16.msra.mxu0 0
    %562 = vmatprep.subr.bf16.mxu0 0
    %563 = vmatpush1.bf16.msra.mxu0 0
    %564 = vmatprep.subr.bf16.mxu0 0
    %565 = vmatpush1.bf16.msra.mxu0 0
    %566 = vmatprep.subr.bf16.mxu0 0
    %567 = vmatpush1.bf16.msra.mxu0 0
    %568 = vmatprep.subr.bf16.mxu0 0
    %569 = vmatpush1.bf16.msra.mxu0 0
    %570 = vmatprep.subr.bf16.mxu0 0
    %571 = vmatpush1.bf16.msra.mxu0 0
    %572 = vmatprep.subr.bf16.mxu0 0
    %573 = vmatpush1.bf16.msra.mxu0 0
    %574 = vmatprep.subr.bf16.mxu0 0
    %575 = vmatpush1.bf16.msra.mxu0 0
    %576 = vmatprep.subr.bf16.mxu0 0
    %577 = vmatpush1.bf16.msra.mxu0 0
    %578 = vmatprep.subr.bf16.mxu0 0
    %579 = vmatpush1.bf16.msra.mxu0 0
    %580 = vmatprep.subr.bf16.mxu0 0
    %581 = vmatpush1.bf16.msra.mxu0 0
    %582 = vmatprep.subr.bf16.mxu0 0
    %583 = vmatpush1.bf16.msra.mxu0 0
    %584 = vmatprep.subr.bf16.mxu0 0
    %585 = vmatpush1.bf16.msra.mxu0 0
    %586 = vmatprep.subr.bf16.mxu0 0
    %587 = vmatpush1.bf16.msra.mxu0 0
    %588 = vmatprep.mubr.bf16.mxu0 0
    %589 = vmatmul.mubr.bf16.gmra.mrb[0].mxu0 %v554
    %v590 = vpop.f32.mrb[0].mxu0
    %v591 = vadd.f32 %v540, %v590
    %v592 = vpop.f32.mrb[0].mxu0
    %v593 = vpop.f32.mrb[0].mxu0
    %v594 = vadd.f32 %v540, %v593
    %v595 = vpop.f32.mrb[0].mxu0
    %596 = vdwg.mxu0
    %v597 = vadd.f32 %v43, %v591
    %v598 = vadd.f32 %v44, %v594
    %v599 = vsel %vm75, %v597, 0.0
    %600 = vadd.xlane.f32.xlu0 %v599
    %v601 = vpop.xlane.xlu0 %600
    %v602 = vsel %vm75, %v598, 0.0
    %603 = vadd.xlane.f32.xlu0 %v602
    %v604 = vpop.xlane.xlu0 %603
    %v605 = vmul.f32 %v601, %v82
    %v606 = vmul.f32 %v604, %v82
    %v607 = vsub.f32 %v597, %v605
    %v608 = vsub.f32 %v598, %v606
    %v609 = vmul.f32 %v607, %v607
    %v610 = vmul.f32 %v608, %v608
    %v611 = vsel %vm75, %v609, 0.0
    %612 = vadd.xlane.f32.xlu0 %v611
    %v613 = vpop.xlane.xlu0 %612
    %v614 = vsel %vm75, %v610, 0.0
    %615 = vadd.xlane.f32.xlu0 %v614
    %v616 = vpop.xlane.xlu0 %615
    %v617 = vmul.f32 %v613, %v82
    %v618 = vmul.f32 %v616, %v82
    %v619 = vadd.f32 %v617, 1e-05
    %v620 = vadd.f32 %v618, 1e-05
    %v621 = vrsqrt.pop %v619
    %v622 = vrsqrt.pop %v620
    %v623 = vmul.f32 %v607, %v621
    %v624 = vmul.f32 %v608, %v622
    %v625 = vlaneseq
    %v626 = vshrl.u32 %v625, 7
    %v627 = vsub.s32 2, %v626
    %v628 = vrot.slane %v73, %v627
    %v629 = vmul.f32 %v623, %v628
    %v630 = vmul.f32 %v624, %v628
    %v631 = vlaneseq
    %v632 = vshrl.u32 %v631, 7
    %v633 = vsub.s32 3, %v632
    %v634 = vrot.slane %v73, %v633
    %v635 = vadd.f32 %v629, %v634
    %v636 = vadd.f32 %v630, %v634
    %v637 = vpack.c.bf16 %v636, %v635
    %v638 = vlaneseq
    %v639 = vshrl.u32 %v638, 7
    %v640 = vsub.s32 6, %v639
    %v641 = vrot.slane %v73, %v640
    %v642 = vunpack.c.h.b16 %v50
    %v643 = vunpack.c.h.b16 %v52
    %v644 = vunpack.c.h.b16 %v54
    %v645 = vunpack.c.h.b16 %v56
    %v646 = vpack.c.b16 %v643, %v642
    %v647 = vpack.c.b16 %v645, %v644
    %v651 = vsel %vm75, %v637, 0
    %653 = vmatprep.subr.bf16.mxu0 0
    %654 = vmatpush1.bf16.msra.mxu0 %v646
    %655 = vmatprep.subr.bf16.mxu0 0
    %656 = vmatpush1.bf16.msra.mxu0 %v647
    %657 = vmatprep.subr.bf16.mxu0 0
    %658 = vmatpush1.bf16.msra.mxu0 0
    %659 = vmatprep.subr.bf16.mxu0 0
    %660 = vmatpush1.bf16.msra.mxu0 0
    %661 = vmatprep.subr.bf16.mxu0 0
    %662 = vmatpush1.bf16.msra.mxu0 0
    %663 = vmatprep.subr.bf16.mxu0 0
    %664 = vmatpush1.bf16.msra.mxu0 0
    %665 = vmatprep.subr.bf16.mxu0 0
    %666 = vmatpush1.bf16.msra.mxu0 0
    %667 = vmatprep.subr.bf16.mxu0 0
    %668 = vmatpush1.bf16.msra.mxu0 0
    %669 = vmatprep.subr.bf16.mxu0 0
    %670 = vmatpush1.bf16.msra.mxu0 0
    %671 = vmatprep.subr.bf16.mxu0 0
    %672 = vmatpush1.bf16.msra.mxu0 0
    %673 = vmatprep.subr.bf16.mxu0 0
    %674 = vmatpush1.bf16.msra.mxu0 0
    %675 = vmatprep.subr.bf16.mxu0 0
    %676 = vmatpush1.bf16.msra.mxu0 0
    %677 = vmatprep.subr.bf16.mxu0 0
    %678 = vmatpush1.bf16.msra.mxu0 0
    %679 = vmatprep.subr.bf16.mxu0 0
    %680 = vmatpush1.bf16.msra.mxu0 0
    %681 = vmatprep.subr.bf16.mxu0 0
    %682 = vmatpush1.bf16.msra.mxu0 0
    %683 = vmatprep.subr.bf16.mxu0 0
    %684 = vmatpush1.bf16.msra.mxu0 0
    %685 = vmatprep.mubr.bf16.mxu0 0
    %686 = vmatmul.mubr.bf16.gmra.mrb[0].mxu0 %v651
    %v687 = vpop.f32.mrb[0].mxu0
    %v688 = vadd.f32 %v641, %v687
    %v689 = vpop.f32.mrb[0].mxu0
    %v690 = vpop.f32.mrb[0].mxu0
    %v691 = vadd.f32 %v641, %v690
    %v692 = vpop.f32.mrb[0].mxu0
    %693 = vdwg.mxu0
    %v694 = vmul.f32 %v688, 0.5
    %v695 = vmul.f32 %v691, 0.5
    %v696 = vmul.f32 %v688, 0.70710677
    %v697 = vmul.f32 %v691, 0.70710677
    %v698 = verf.f32.pop %v696
    %v699 = verf.f32.pop %v697
    %v700 = vadd.f32 %v698, 1.0
    %v701 = vadd.f32 %v699, 1.0
    %v702 = vmul.f32 %v694, %v700
    %v703 = vmul.f32 %v695, %v701
    %v704 = vpack.c.bf16 %v703, %v702
    %v705 = vlaneseq
    %v706 = vshrl.u32 %v705, 7
    %v707 = vsub.s32 5, %v706
    %v708 = vrot.slane %v73, %v707
    %v725 = vunpack.c.l.b16 %v57
    %v726 = vunpack.c.l.b16 %v58
    %v727 = vunpack.c.l.b16 %v59
    %v728 = vunpack.c.l.b16 %v60
    %v729 = vunpack.c.l.b16 %v61
    %v730 = vunpack.c.l.b16 %v62
    %v731 = vunpack.c.l.b16 %v63
    %v732 = vunpack.c.l.b16 %v64
    %v733 = vunpack.c.l.b16 %v65
    %v734 = vunpack.c.l.b16 %v66
    %v735 = vunpack.c.l.b16 %v67
    %v736 = vunpack.c.l.b16 %v68
    %v737 = vunpack.c.l.b16 %v69
    %v738 = vunpack.c.l.b16 %v70
    %v739 = vunpack.c.l.b16 %v71
    %v740 = vunpack.c.l.b16 %v72
    %v741 = vpack.c.b16 %v726, %v725
    %v742 = vpack.c.b16 %v728, %v727
    %v743 = vpack.c.b16 %v730, %v729
    %v744 = vpack.c.b16 %v732, %v731
    %v745 = vpack.c.b16 %v734, %v733
    %v746 = vpack.c.b16 %v736, %v735
    %v747 = vpack.c.b16 %v738, %v737
    %v748 = vpack.c.b16 %v740, %v739
    %757 = vmatprep.subr.bf16.mxu0 0
    %758 = vmatpush1.bf16.msra.mxu0 %v741
    %759 = vmatprep.subr.bf16.mxu0 0
    %760 = vmatpush1.bf16.msra.mxu0 %v742
    %761 = vmatprep.subr.bf16.mxu0 0
    %762 = vmatpush1.bf16.msra.mxu0 %v743
    %763 = vmatprep.subr.bf16.mxu0 0
    %764 = vmatpush1.bf16.msra.mxu0 %v744
    %765 = vmatprep.subr.bf16.mxu0 0
    %766 = vmatpush1.bf16.msra.mxu0 %v745
    %767 = vmatprep.subr.bf16.mxu0 0
    %768 = vmatpush1.bf16.msra.mxu0 %v746
    %769 = vmatprep.subr.bf16.mxu0 0
    %770 = vmatpush1.bf16.msra.mxu0 %v747
    %771 = vmatprep.subr.bf16.mxu0 0
    %772 = vmatpush1.bf16.msra.mxu0 %v748
    %773 = vmatprep.subr.bf16.mxu0 0
    %774 = vmatpush1.bf16.msra.mxu0 0
    %775 = vmatprep.subr.bf16.mxu0 0
    %776 = vmatpush1.bf16.msra.mxu0 0
    %777 = vmatprep.subr.bf16.mxu0 0
    %778 = vmatpush1.bf16.msra.mxu0 0
    %779 = vmatprep.subr.bf16.mxu0 0
    %780 = vmatpush1.bf16.msra.mxu0 0
    %781 = vmatprep.subr.bf16.mxu0 0
    %782 = vmatpush1.bf16.msra.mxu0 0
    %783 = vmatprep.subr.bf16.mxu0 0
    %784 = vmatpush1.bf16.msra.mxu0 0
    %785 = vmatprep.subr.bf16.mxu0 0
    %786 = vmatpush1.bf16.msra.mxu0 0
    %787 = vmatprep.subr.bf16.mxu0 0
    %788 = vmatpush1.bf16.msra.mxu0 0
    %789 = vmatprep.mubr.bf16.mxu0 0
    %790 = vmatmul.mubr.bf16.gmra.mrb[0].mxu0 %v704
    %v791 = vpop.f32.mrb[0].mxu0
    %v792 = vadd.f32 %v708, %v791
    %v793 = vpop.f32.mrb[0].mxu0
    %v794 = vpop.f32.mrb[0].mxu0
    %v795 = vadd.f32 %v708, %v794
    %v796 = vpop.f32.mrb[0].mxu0
    %797 = vdwg.mxu0
    %v798 = vadd.f32 %v597, %v792
    %v799 = vadd.f32 %v598, %v795
    %800 = vst.msk [vmem:[#allocation5] sm:$0xff] %vm75, %v798
    %801 = vst.msk [vmem:[#allocation5 + $0x8] sm:$0xff] %vm75, %v799
    // Predicated region
    $region30: #{tpu_custom_call.1} parent=1 // pred_check
      _
    $region31: #{tpu_custom_call.1} parent=1 // pred_check_branch
      %803 = sbr.rel (0) target = $region33
    $region32: #{tpu_custom_call.1} parent=1 // pred_region
      %s805 = ssub.s32 256, 256
      %806 = vsyncadd [#allocation4], %s805
      %s807 = sshll.u32 [#allocation5], 4
      %s808 = int_to_ptr.vmem [resolvable:$true] %s807
      %813 = dma.vmem_to_hbm [thread:$0]  %s808, 256, %s6, [#allocation4], 128, 128, 8
    $region33: #{tpu_custom_call.1} parent=1 // pred_fallthru
      _
    // Predicated region
    $region34: #{tpu_custom_call.1} parent=1 // pred_check
      _
    $region35: #{tpu_custom_call.1} parent=1 // pred_check_branch
      %815 = sbr.rel (0) target = $region37
    $region36: #{tpu_custom_call.1} parent=1 // pred_region
      %816 = dma.done [#allocation4], 256
    $region37: #{tpu_custom_call.1} parent=1 // pred_fallthru
      _
    %817 = vsyncpa [#allocation3], 1
    %818 = vsyncpa [#allocation4], 1

</llo_original>
